<compile_context>
chip_gen: v5e
topology: v5e:2x2
jax: 0.10.0
libtpu: 0.0.40
codegen_flags: <defaults>
</compile_context>

<pallas_src>
import functools

import jax
import jax.numpy as jnp
from jax.experimental import pallas as pl
from jax.experimental.pallas import tpu as pltpu

KS = 3                        # fixed 3x3, stride=1, padding=1 (module defaults)
LANES = 128
_VMEM_BUDGET = 12 * 1024 * 1024   # per-grid-step working-set target (all gens)
_VMEM_LIMIT = 32 * 1024 * 1024    # explicit scoped-VMEM limit (safe on v5e/v6e/v7x)
_HALO_FLAT_PAD = 8            # "halo" mode: zero rows so the (kh=2,kw=2) tap slice is in-bounds
_KW_PACK_MAX_CIN = 64         # kw-packed layout (3x Cin in HBM) only pays off for small Cin


def _round_up(x, m):
    return (x + m - 1) // m * m


def _tile_sizes(th, W, Cin, mode):
    """(rows_in, k_in, rows_out, n_taps) for one row tile of height `th`."""
    if mode == "kw_packed":
        return (th + 2) * W, KS * Cin, th * W, KS
    Wp = W + 2
    return (th + 2) * Wp + _HALO_FLAT_PAD, Cin, th * Wp, KS * KS


def _pick_row_tile(H, W, Cin, Cout_pad, mode, budget=_VMEM_BUDGET):
    """Largest divisor of H whose double-buffered tiles fit the VMEM budget."""
    best = 1
    for th in range(1, H + 1):
        if H % th:
            continue
        rows_in, k_in, rows_out, n_taps = _tile_sizes(th, W, Cin, mode)
        need = (2 * rows_in * k_in * 2            # 2x-buffered bf16 input tile
                + 2 * rows_out * Cout_pad * 4     # 2x-buffered f32 output tile
                + n_taps * k_in * Cout_pad * 2    # resident bf16 weights
                + Cout_pad * 4)                   # shift
        if need <= budget:
            best = th
    return best
    # TODO(synk): for H with no good divisor, pad H up to a multiple of the tile.


def _conv_kernel(xt_ref, w_ref, shift_ref, out_ref, *, offsets, rows_out):
    # xt_ref   : (1, 1, rows_in, K_in)        bf16 flattened halo tile
    # w_ref    : (n_taps, K_in, Cout_pad)     bf16, BN scale pre-folded
    # shift_ref: (1, Cout_pad)                f32 BN shift
    # out_ref  : (1, 1, rows_out, Cout_pad)   f32, used directly as accumulator
    for t, off in enumerate(offsets):
        lhs = xt_ref[0, 0, pl.ds(off, rows_out), :]          # static shifted tap slice
        contrib = jnp.dot(lhs, w_ref[t], preferred_element_type=jnp.float32)
        if t == 0:
            out_ref[0, 0] = contrib + shift_ref[0]           # fold BN shift into first tap
        else:
            out_ref[0, 0] += contrib


@functools.partial(jax.jit, static_argnames=("eps", "row_tile", "mode"))
def conv_bn_relu_forward(x_nchw, weight_oihw, gamma, beta, run_mean, run_var,
                         eps=1e-5, row_tile=None, mode=None):
    """Pallas implementation of ConvBNReLU.forward (conv -> inference BN, no ReLU)."""
    N, Cin, H, W = x_nchw.shape
    Cout = weight_oihw.shape[0]
    Cout_pad = _round_up(Cout, LANES)

    if mode is None:
        mode = "kw_packed" if Cin <= _KW_PACK_MAX_CIN else "halo"
    if row_tile is None:
        row_tile = _pick_row_tile(H, W, Cin, Cout_pad, mode)
    TH = int(row_tile)
    assert H % TH == 0, (H, TH)
    n_tiles = H // TH
    rows_in, K_in, rows_out, n_taps = _tile_sizes(TH, W, Cin, mode)

    # ---- weights / BN: fold scale into weights, pad Cout to a lane multiple --
    scale = (gamma / jnp.sqrt(run_var + eps)).astype(jnp.float32)        # (Cout,)
    shift = (beta - run_mean * scale).astype(jnp.float32)                # (Cout,)
    w = jnp.transpose(weight_oihw.astype(jnp.float32), (2, 3, 1, 0))     # (kh,kw,Cin,Cout)
    w = w * scale
    if mode == "kw_packed":
        w = w.reshape(KS, KS * Cin, Cout)        # per-kh weight, K = (kw, Cin) flattened
    else:
        w = w.reshape(KS * KS, Cin, Cout)        # per-tap weight, K = Cin
    w = jnp.pad(w, ((0, 0), (0, 0), (0, Cout_pad - Cout))).astype(jnp.bfloat16)
    shift_p = jnp.pad(shift, (0, Cout_pad - Cout)).reshape(1, Cout_pad)

    # ---- wrapper glue: NCHW->NHWC, pad, row-tile with 2-row halo, flatten -----
    x_nhwc = jnp.transpose(x_nchw, (0, 2, 3, 1)).astype(jnp.bfloat16)
    xpad = jnp.pad(x_nhwc, ((0, 0), (1, 1), (1, 1), (0, 0)))             # (N,H+2,W+2,Cin)
    if mode == "kw_packed":
        # Pack the 3 kw shifts along channels: xk[n,h,w, kw*Cin+c] = xpad[n,h,w+kw,c].
        xk = jnp.concatenate([xpad[:, :, kw:kw + W, :] for kw in range(KS)], axis=-1)
        tiles = [xk[:, t * TH:t * TH + TH + 2] for t in range(n_tiles)]
        x_tiles = jnp.stack(tiles, axis=1).reshape(N, n_tiles, (TH + 2) * W, KS * Cin)
        offsets = tuple(kh * W for kh in range(KS))
        W_eff = W                                # output rows are exactly W wide
    else:
        Wp = W + 2
        tiles = [xpad[:, t * TH:t * TH + TH + 2] for t in range(n_tiles)]
        x_tiles = jnp.stack(tiles, axis=1).reshape(N, n_tiles, (TH + 2) * Wp, Cin)
        x_tiles = jnp.pad(x_tiles, ((0, 0), (0, 0), (0, _HALO_FLAT_PAD), (0, 0)))
        offsets = tuple(kh * Wp + kw for kh in range(KS) for kw in range(KS))
        W_eff = Wp                               # 2 garbage columns per row, cropped below

    kernel = functools.partial(_conv_kernel, offsets=offsets, rows_out=rows_out)

    out = pl.pallas_call(
        kernel,
        out_shape=jax.ShapeDtypeStruct((N, n_tiles, rows_out, Cout_pad), jnp.float32),
        grid_spec=pltpu.PrefetchScalarGridSpec(
            num_scalar_prefetch=0,
            grid=(N, n_tiles),
            in_specs=[
                pl.BlockSpec((1, 1, rows_in, K_in), lambda n, t: (n, t, 0, 0)),
                pl.BlockSpec((n_taps, K_in, Cout_pad), lambda n, t: (0, 0, 0)),
                pl.BlockSpec((1, Cout_pad), lambda n, t: (0, 0)),
            ],
            out_specs=pl.BlockSpec((1, 1, rows_out, Cout_pad),
                                   lambda n, t: (n, t, 0, 0)),
        ),
        compiler_params=pltpu.CompilerParams(
            dimension_semantics=("parallel", "parallel"),
            vmem_limit_bytes=_VMEM_LIMIT),
    )(x_tiles, w, shift_p)

    # ---- crop width/Cout padding, back to NCHW (fused by XLA under jit) ------
    out = out.reshape(N, n_tiles, TH, W_eff, Cout_pad)[:, :, :, :W, :Cout]
    out = out.reshape(N, H, W, Cout)
    return jnp.transpose(out, (0, 3, 1, 2))


def reference_forward(x_nchw, weight_oihw, gamma, beta, run_mean, run_var,
                      eps=1e-5):
    """Plain-JAX f32 reference (conv + inference BN) for validation."""
    y = jax.lax.conv_general_dilated(
        x_nchw, weight_oihw, window_strides=(1, 1),
        padding=((1, 1), (1, 1)),
        dimension_numbers=("NCHW", "OIHW", "NCHW"))
    scale = gamma / jnp.sqrt(run_var + eps)
    shift = beta - run_mean * scale
    return y * scale[None, :, None, None] + shift[None, :, None, None]


if __name__ == "__main__":
    # Small shapes consistent with the module: batch=2, in_chan=4, out_chan=8, 16x16.
    N, Cin, Cout, H, W = 2, 4, 8, 16, 16

    key = jax.random.PRNGKey(0)
    kx, kw_, kg, kb, km, kv = jax.random.split(key, 6)

    x = jax.random.normal(kx, (N, Cin, H, W), dtype=jnp.float32)

    # Conv weight: kaiming_normal_(a=1) => std = 1/sqrt(fan_in), fan_in = Cin*ks*ks.
    fan_in = Cin * KS * KS
    weight = jax.random.normal(kw_, (Cout, Cin, KS, KS), dtype=jnp.float32) / jnp.sqrt(
        jnp.float32(fan_in))

    # BatchNorm parameters / running stats (inference-mode BN).
    gamma = 0.5 + jax.random.uniform(kg, (Cout,), dtype=jnp.float32)
    beta = 0.1 * jax.random.normal(kb, (Cout,), dtype=jnp.float32)
    run_mean = 0.1 * jax.random.normal(km, (Cout,), dtype=jnp.float32)
    run_var = 0.5 + jax.random.uniform(kv, (Cout,), dtype=jnp.float32)

    ref = jax.block_until_ready(
        reference_forward(x, weight, gamma, beta, run_mean, run_var))

    # Exercise: auto config (kw_packed, full-height tile), kw_packed with several
    # row tiles (halo path), and the large-Cin "halo" layout as well.
    configs = [
        dict(),
        dict(row_tile=4),
        dict(mode="halo", row_tile=8),
    ]
    for cfg in configs:
        out = conv_bn_relu_forward(x, weight, gamma, beta, run_mean, run_var, **cfg)
        out = jax.block_until_ready(out)
        assert out.shape == (N, Cout, H, W), (cfg, out.shape)
        # bf16 operands on the MXU (f32 accumulation) -> looser tolerance than f32.
        max_err = float(jnp.max(jnp.abs(out - ref)))
        assert jnp.allclose(out, ref, atol=3e-2, rtol=3e-2), (cfg, max_err)

    print("KERNEL_OK")
</pallas_src>

<mosaic_0001>
module attributes {stable_mosaic.version = 11 : i64} {
  func.func @_conv_kernel(%arg0: i32, %arg1: i32, %arg2: memref<1x1x288x12xbf16, #tpu.memory_space<vmem>>, %arg3: memref<3x12x128xbf16, #tpu.memory_space<vmem>>, %arg4: memref<1x128xf32, #tpu.memory_space<vmem>>, %arg5: memref<1x1x256x128xf32, #tpu.memory_space<vmem>>) attributes {dimension_semantics = [#tpu.dimension_semantics<parallel>, #tpu.dimension_semantics<parallel>], iteration_bounds = array<i64: 2, 1>, scalar_prefetch = 0 : i64, scratch_operands = 0 : i64, tpu.core_type = #tpu.core_type<tc>, window_params = [{transform_indices = @transform_0, window_bounds = array<i64: 1, 1, 288, 12>}, {pipeline_mode = #tpu.pipeline_mode<synchronous>, transform_indices = @transform_1, window_bounds = array<i64: 3, 12, 128>}, {pipeline_mode = #tpu.pipeline_mode<synchronous>, transform_indices = @transform_2, window_bounds = array<i64: 1, 128>}, {transform_indices = @transform_3, window_bounds = array<i64: 1, 1, 256, 128>}]} {
    %c0 = arith.constant 0 : index
    %c0_0 = arith.constant 0 : index
    %c0_1 = arith.constant 0 : index
    %c0_2 = arith.constant 0 : index
    %0 = vector.load %arg2[%c0, %c0_0, %c0_1, %c0_2] : memref<1x1x288x12xbf16, #tpu.memory_space<vmem>>, vector<1x1x256x12xbf16>
    %1 = vector.shape_cast %0 : vector<1x1x256x12xbf16> to vector<256x12xbf16>
    %c0_3 = arith.constant 0 : index
    %c0_4 = arith.constant 0 : index
    %c0_5 = arith.constant 0 : index
    %2 = vector.load %arg3[%c0_3, %c0_4, %c0_5] : memref<3x12x128xbf16, #tpu.memory_space<vmem>>, vector<1x12x128xbf16>
    %3 = vector.shape_cast %2 : vector<1x12x128xbf16> to vector<12x128xbf16>
    %cst = arith.constant dense<0.000000e+00> : vector<256x128xf32>
    %4 = tpu.matmul %1, %3, %cst {dimension_numbers = #tpu.dot_dimension_numbers<[1], [0], [0], [1], [0, 0, 1, 1], [], []>} : vector<256x12xbf16>, vector<12x128xbf16>, vector<256x128xf32> -> vector<256x128xf32>
    %c0_6 = arith.constant 0 : index
    %c0_7 = arith.constant 0 : index
    %5 = vector.load %arg4[%c0_6, %c0_7] : memref<1x128xf32, #tpu.memory_space<vmem>>, vector<1x128xf32>
    %6 = vector.shape_cast %5 : vector<1x128xf32> to vector<128xf32>
    %7 = vector.shape_cast %6 : vector<128xf32> to vector<1x128xf32>
    %8 = vector.broadcast %7 : vector<1x128xf32> to vector<256x128xf32>
    %9 = arith.addf %4, %8 : vector<256x128xf32>
    %c0_8 = arith.constant 0 : index
    %c0_9 = arith.constant 0 : index
    %c0_10 = arith.constant 0 : index
    %c0_11 = arith.constant 0 : index
    %10 = vector.load %arg5[%c0_8, %c0_9, %c0_10, %c0_11] : memref<1x1x256x128xf32, #tpu.memory_space<vmem>>, vector<1x1x256x128xf32>
    %11 = vector.shape_cast %10 : vector<1x1x256x128xf32> to vector<256x128xf32>
    %12 = vector.shape_cast %9 : vector<256x128xf32> to vector<1x1x256x128xf32>
    tpu.vector_store %arg5[%c0_8, %c0_9, %c0_10, %c0_11], %12 {strides = array<i32>} : memref<1x1x256x128xf32, #tpu.memory_space<vmem>>, vector<1x1x256x128xf32>,
    %c0_12 = arith.constant 0 : index
    %c0_13 = arith.constant 0 : index
    %c16 = arith.constant 16 : index
    %c0_14 = arith.constant 0 : index
    %13 = vector.load %arg2[%c0_12, %c0_13, %c16, %c0_14] : memref<1x1x288x12xbf16, #tpu.memory_space<vmem>>, vector<1x1x256x12xbf16>
    %14 = vector.shape_cast %13 : vector<1x1x256x12xbf16> to vector<256x12xbf16>
    %c1 = arith.constant 1 : index
    %c0_15 = arith.constant 0 : index
    %c0_16 = arith.constant 0 : index
    %15 = vector.load %arg3[%c1, %c0_15, %c0_16] : memref<3x12x128xbf16, #tpu.memory_space<vmem>>, vector<1x12x128xbf16>
    %16 = vector.shape_cast %15 : vector<1x12x128xbf16> to vector<12x128xbf16>
    %cst_17 = arith.constant dense<0.000000e+00> : vector<256x128xf32>
    %17 = tpu.matmul %14, %16, %cst_17 {dimension_numbers = #tpu.dot_dimension_numbers<[1], [0], [0], [1], [0, 0, 1, 1], [], []>} : vector<256x12xbf16>, vector<12x128xbf16>, vector<256x128xf32> -> vector<256x128xf32>
    %c0_18 = arith.constant 0 : index
    %c0_19 = arith.constant 0 : index
    %c0_20 = arith.constant 0 : index
    %c0_21 = arith.constant 0 : index
    %18 = vector.load %arg5[%c0_18, %c0_19, %c0_20, %c0_21] : memref<1x1x256x128xf32, #tpu.memory_space<vmem>>, vector<1x1x256x128xf32>
    %19 = vector.shape_cast %18 : vector<1x1x256x128xf32> to vector<256x128xf32>
    %20 = arith.addf %19, %17 : vector<256x128xf32>
    %c0_22 = arith.constant 0 : index
    %c0_23 = arith.constant 0 : index
    %c0_24 = arith.constant 0 : index
    %c0_25 = arith.constant 0 : index
    %21 = vector.load %arg5[%c0_22, %c0_23, %c0_24, %c0_25] : memref<1x1x256x128xf32, #tpu.memory_space<vmem>>, vector<1x1x256x128xf32>
    %22 = vector.shape_cast %21 : vector<1x1x256x128xf32> to vector<256x128xf32>
    %23 = vector.shape_cast %20 : vector<256x128xf32> to vector<1x1x256x128xf32>
    tpu.vector_store %arg5[%c0_22, %c0_23, %c0_24, %c0_25], %23 {strides = array<i32>} : memref<1x1x256x128xf32, #tpu.memory_space<vmem>>, vector<1x1x256x128xf32>,
    %c0_26 = arith.constant 0 : index
    %c0_27 = arith.constant 0 : index
    %c32 = arith.constant 32 : index
    %c0_28 = arith.constant 0 : index
    %24 = vector.load %arg2[%c0_26, %c0_27, %c32, %c0_28] : memref<1x1x288x12xbf16, #tpu.memory_space<vmem>>, vector<1x1x256x12xbf16>
    %25 = vector.shape_cast %24 : vector<1x1x256x12xbf16> to vector<256x12xbf16>
    %c2 = arith.constant 2 : index
    %c0_29 = arith.constant 0 : index
    %c0_30 = arith.constant 0 : index
    %26 = vector.load %arg3[%c2, %c0_29, %c0_30] : memref<3x12x128xbf16, #tpu.memory_space<vmem>>, vector<1x12x128xbf16>
    %27 = vector.shape_cast %26 : vector<1x12x128xbf16> to vector<12x128xbf16>
    %cst_31 = arith.constant dense<0.000000e+00> : vector<256x128xf32>
    %28 = tpu.matmul %25, %27, %cst_31 {dimension_numbers = #tpu.dot_dimension_numbers<[1], [0], [0], [1], [0, 0, 1, 1], [], []>} : vector<256x12xbf16>, vector<12x128xbf16>, vector<256x128xf32> -> vector<256x128xf32>
    %c0_32 = arith.constant 0 : index
    %c0_33 = arith.constant 0 : index
    %c0_34 = arith.constant 0 : index
    %c0_35 = arith.constant 0 : index
    %29 = vector.load %arg5[%c0_32, %c0_33, %c0_34, %c0_35] : memref<1x1x256x128xf32, #tpu.memory_space<vmem>>, vector<1x1x256x128xf32>
    %30 = vector.shape_cast %29 : vector<1x1x256x128xf32> to vector<256x128xf32>
    %31 = arith.addf %30, %28 : vector<256x128xf32>
    %c0_36 = arith.constant 0 : index
    %c0_37 = arith.constant 0 : index
    %c0_38 = arith.constant 0 : index
    %c0_39 = arith.constant 0 : index
    %32 = vector.load %arg5[%c0_36, %c0_37, %c0_38, %c0_39] : memref<1x1x256x128xf32, #tpu.memory_space<vmem>>, vector<1x1x256x128xf32>
    %33 = vector.shape_cast %32 : vector<1x1x256x128xf32> to vector<256x128xf32>
    %34 = vector.shape_cast %31 : vector<256x128xf32> to vector<1x1x256x128xf32>
    tpu.vector_store %arg5[%c0_36, %c0_37, %c0_38, %c0_39], %34 {strides = array<i32>} : memref<1x1x256x128xf32, #tpu.memory_space<vmem>>, vector<1x1x256x128xf32>,
    return
  }
  func.func @transform_0(%arg0: i32, %arg1: i32) -> (i32, i32, i32, i32) {
    %c0_i32 = arith.constant 0 : i32
    %c0_i32_0 = arith.constant 0 : i32
    %c0_i32_1 = arith.constant 0 : i32
    return %arg0, %arg1, %c0_i32, %c0_i32_0 : i32, i32, i32, i32
  }
  func.func @transform_1(%arg0: i32, %arg1: i32) -> (i32, i32, i32) {
    %c0_i32 = arith.constant 0 : i32
    %c0_i32_0 = arith.constant 0 : i32
    %c0_i32_1 = arith.constant 0 : i32
    %c0_i32_2 = arith.constant 0 : i32
    return %c0_i32, %c0_i32_0, %c0_i32_1 : i32, i32, i32
  }
  func.func @transform_2(%arg0: i32, %arg1: i32) -> (i32, i32) {
    %c0_i32 = arith.constant 0 : i32
    %c0_i32_0 = arith.constant 0 : i32
    %c0_i32_1 = arith.constant 0 : i32
    return %c0_i32, %c0_i32_0 : i32, i32
  }
  func.func @transform_3(%arg0: i32, %arg1: i32) -> (i32, i32, i32, i32) {
    %c0_i32 = arith.constant 0 : i32
    %c0_i32_0 = arith.constant 0 : i32
    %c0_i32_1 = arith.constant 0 : i32
    return %arg0, %arg1, %c0_i32, %c0_i32_0 : i32, i32, i32, i32
  }
}

</mosaic_0001>

<llo_original>
// kernel: conv_bn_relu_forward.1
$region0: #{conv_bn_relu_forward.1}
  #allocation0 [shape = 'u32[]', space=smem, size = 0x4, offset = 0x4, fixed_abs, tag = 'smem constant byte address 0x4 - core index']
  #allocation1 [shape = 'u32[72,128]{1,0:T(1,128)}', space=vmem, size = 0x9000, scoped, tag = 'internal scratch']
  %s0 = inlined_call_operand.vmem [shape: bf16[2,1,288,12], index: 0, kind: input, shape index: {}]
  %s1 = inlined_call_operand.vmem [shape: bf16[3,12,128], index: 1, kind: input, shape index: {}]
  %s2 = inlined_call_operand.vmem [shape: f32[1,128], index: 2, kind: input, shape index: {}]
  %s3 = inlined_call_operand.vmem [shape: f32[2,1,256,128], index: 3, kind: output, shape index: {}]
  %s4 = sld [smem:[#allocation0]]
  $region45: #{conv_bn_relu_forward.1} parent=0
    _
  %s6 = ssub.s32 1, %s4
  %s7 = scalar_select 0, %s6, %s4
  loop: start=0, step=1, limit=4
  $region2: #{conv_bn_relu_forward.1} parent=0 // loop_pre_header
    _
  $region3: #{conv_bn_relu_forward.1} parent=0 // loop_header
    %s9 = sphi 0, %s13
    %p10 = scmp.ge.s32.totalorder %s9, 4
    %s16 = sphi 0, %s28
    %s17 = sphi 0, %s24
    %s18 = sphi 0, %s16
    %s19 = sphi 0, %s17
    %s20 = sphi 0, %s18
    %s21 = sphi 0, %s19
    %s33 = sphi 0, %s35
    %s36 = sphi 0, %s33
    %s37 = sphi 0, %s36
    %s53 = sphi 0, %s37
    %s57 = sphi 0, %s57
    %s59 = sphi 0, %s57
    %s60 = sphi 0, %s59
    %s74 = sphi 0, %s60
    %s78 = sphi 0, %s78
    %s80 = sphi 0, %s78
    %s81 = sphi 0, %s80
    %s95 = sphi 0, %s81
    %s103 = sphi 0, %s105
    %s106 = sphi 0, %s103
    %s107 = sphi 0, %s106
    %s123 = sphi 0, %s107
  $region4: #{conv_bn_relu_forward.1} parent=0 // loop_header_branch
    %12 = sbr.rel (%p10) target = $region8
  $region5: #{conv_bn_relu_forward.1} parent=0 // loop_body
    %s14 = ssub.s32 %s9, 1
    %s15 = ssub.s32 %s9, 2
    %s22 = sadd.s32 1, %s17
    %p23 = scmp.ge.s32.totalorder %s22, 1
    %s24 = scalar_select %p23, 0, %s22
    %s25 = sadd.s32 1, %s16
    %s26 = scalar_select %p23, %s25, %s16
    %p27 = scmp.ge.s32.totalorder %s26, 2
    %s28 = scalar_select %p27, 0, %s26
    %s29 = ssub.s32 %s16, %s28
    %s30 = ssub.s32 %s17, %s24
    %s31 = sor.u32 %s29, %s30
    %p32 = scmp.eq.s32.totalorder %s31, 0
    %s34 = sadd.s32 %s33, 1
    %s35 = scalar_select %p32, %s33, %s34
    %p38 = pneg %p32
    %p39 = scmp.eq.s32.totalorder %s9, 1
    %p40 = por %p38, %p39
    %p41 = scmp.ne.s32.totalorder %s33, %s36
    %p42 = scmp.eq.s32.totalorder %s9, 0
    %p43 = por %p41, %p42
    %p44 = scmp.ne.s32.totalorder %s33, %s36
    %p45 = scmp.eq.s32.totalorder %s14, 1
    %p46 = por %p44, %p45
    %p47 = scmp.ne.s32.totalorder %s36, %s37
    %p48 = scmp.eq.s32.totalorder %s14, 0
    %p49 = por %p47, %p48
    %p50 = scmp.ne.s32.totalorder %s36, %s37
    %p51 = scmp.eq.s32.totalorder %s15, 1
    %p52 = por %p50, %p51
    %p54 = scmp.ne.s32.totalorder %s37, %s53
    %p55 = scmp.eq.s32.totalorder %s15, 0
    %p56 = por %p54, %p55
    %s58 = sadd.s32 %s57, 1
    %p61 = scmp.eq.s32.totalorder %s9, 1
    %p62 = scmp.ne.s32.totalorder %s57, %s59
    %p63 = scmp.eq.s32.totalorder %s9, 0
    %p64 = por %p62, %p63
    %p65 = scmp.ne.s32.totalorder %s57, %s59
    %p66 = scmp.eq.s32.totalorder %s14, 1
    %p67 = por %p65, %p66
    %p68 = scmp.ne.s32.totalorder %s59, %s60
    %p69 = scmp.eq.s32.totalorder %s14, 0
    %p70 = por %p68, %p69
    %p71 = scmp.ne.s32.totalorder %s59, %s60
    %p72 = scmp.eq.s32.totalorder %s15, 1
    %p73 = por %p71, %p72
    %p75 = scmp.ne.s32.totalorder %s60, %s74
    %p76 = scmp.eq.s32.totalorder %s15, 0
    %p77 = por %p75, %p76
    %s79 = sadd.s32 %s78, 1
    %p82 = scmp.eq.s32.totalorder %s9, 1
    %p83 = scmp.ne.s32.totalorder %s78, %s80
    %p84 = scmp.eq.s32.totalorder %s9, 0
    %p85 = por %p83, %p84
    %p86 = scmp.ne.s32.totalorder %s78, %s80
    %p87 = scmp.eq.s32.totalorder %s14, 1
    %p88 = por %p86, %p87
    %p89 = scmp.ne.s32.totalorder %s80, %s81
    %p90 = scmp.eq.s32.totalorder %s14, 0
    %p91 = por %p89, %p90
    %p92 = scmp.ne.s32.totalorder %s80, %s81
    %p93 = scmp.eq.s32.totalorder %s15, 1
    %p94 = por %p92, %p93
    %p96 = scmp.ne.s32.totalorder %s81, %s95
    %p97 = scmp.eq.s32.totalorder %s15, 0
    %p98 = por %p96, %p97
    %s99 = ssub.s32 %s16, %s28
    %s100 = ssub.s32 %s17, %s24
    %s101 = sor.u32 %s99, %s100
    %p102 = scmp.eq.s32.totalorder %s101, 0
    %s104 = sadd.s32 %s103, 1
    %s105 = scalar_select %p102, %s103, %s104
    %p108 = pneg %p102
    %p109 = scmp.eq.s32.totalorder %s9, 1
    %p110 = por %p108, %p109
    %p111 = scmp.ne.s32.totalorder %s103, %s106
    %p112 = scmp.eq.s32.totalorder %s9, 0
    %p113 = por %p111, %p112
    %p114 = scmp.ne.s32.totalorder %s103, %s106
    %p115 = scmp.eq.s32.totalorder %s14, 1
    %p116 = por %p114, %p115
    %p117 = scmp.ne.s32.totalorder %s106, %s107
    %p118 = scmp.eq.s32.totalorder %s14, 0
    %p119 = por %p117, %p118
    %p120 = scmp.ne.s32.totalorder %s106, %s107
    %p121 = scmp.eq.s32.totalorder %s15, 1
    %p122 = por %p120, %p121
    %p124 = scmp.ne.s32.totalorder %s107, %s123
    %p125 = scmp.eq.s32.totalorder %s15, 0
    %p126 = por %p124, %p125
    %p127 = scmp.le.s32.totalorder 1, %s9
    %p128 = scmp.lt.s32.totalorder %s9, 3
    %p129 = pnand %p127, %p128
    %p130 = pneg %p129
    // Predicated region
    $region9: #{conv_bn_relu_forward.1} parent=5 // pred_check
      _
    $region10: #{conv_bn_relu_forward.1} parent=5 // pred_check_branch
      %132 = sbr.rel (%p129) target = $region12
    $region11: #{conv_bn_relu_forward.1} parent=5 // pred_region
      %s133 = ssub.s32 %s9, 1
      // Predicated region
      $region13: #{conv_bn_relu_forward.1} parent=11 // pred_check
        %p134 = pneg %p70
      $region14: #{conv_bn_relu_forward.1} parent=11 // pred_check_branch
        %136 = sbr.rel (%p134) target = $region16
      $region15: #{conv_bn_relu_forward.1} parent=11 // pred_region
        _
      $region16: #{conv_bn_relu_forward.1} parent=11 // pred_fallthru
        _
      // Predicated region
      $region17: #{conv_bn_relu_forward.1} parent=11 // pred_check
        %p137 = pneg %p91
      $region18: #{conv_bn_relu_forward.1} parent=11 // pred_check_branch
        %139 = sbr.rel (%p137) target = $region20
      $region19: #{conv_bn_relu_forward.1} parent=11 // pred_region
        _
      $region20: #{conv_bn_relu_forward.1} parent=11 // pred_fallthru
        _
    $region12: #{conv_bn_relu_forward.1} parent=5 // pred_fallthru
      _
    %p140 = scmp.lt.s32.totalorder %s9, 2
    // Predicated region
    $region21: #{conv_bn_relu_forward.1} parent=5 // pred_check
      %p141 = pneg %p140
    $region22: #{conv_bn_relu_forward.1} parent=5 // pred_check_branch
      %143 = sbr.rel (%p141) target = $region24
    $region23: #{conv_bn_relu_forward.1} parent=5 // pred_region
      // Predicated region
      $region25: #{conv_bn_relu_forward.1} parent=23 // pred_check
        %p144 = pneg %p43
      $region26: #{conv_bn_relu_forward.1} parent=23 // pred_check_branch
        %146 = sbr.rel (%p144) target = $region28
      $region27: #{conv_bn_relu_forward.1} parent=23 // pred_region
        %p147 = scmp.lt.s32.totalorder %s16, 1
        %s148 = scalar_select %p147, %s16, 1
        %p149 = scmp.lt.s32.totalorder %s17, 0
        %s150 = scalar_select %p149, %s17, 0
        %s151 = smul.addr %s150, 36
        %s152 = smul.addr %s148, 36
        %s153 = sadd.s32 %s151, %s152
        %s154 = smul.addr %s153, 4
        %s155 = scalar_lea.vmem %s0, %s154
      $region28: #{conv_bn_relu_forward.1} parent=23 // pred_fallthru
        _
    $region24: #{conv_bn_relu_forward.1} parent=5 // pred_fallthru
      _
    %p156 = scmp.le.s32.totalorder 1, %s9
    %p157 = scmp.lt.s32.totalorder %s9, 3
    %p158 = pnand %p156, %p157
    %p159 = pneg %p158
    // Predicated region
    $region29: #{conv_bn_relu_forward.1} parent=5 // pred_check
      _
    $region30: #{conv_bn_relu_forward.1} parent=5 // pred_check_branch
      %161 = sbr.rel (%p158) target = $region32
    $region31: #{conv_bn_relu_forward.1} parent=5 // pred_region
      %s162 = ssub.s32 %s9, 1
      %p163 = scmp.lt.s32.totalorder %s18, 1
      %s164 = scalar_select %p163, %s18, 1
      %p165 = scmp.lt.s32.totalorder %s19, 0
      %s166 = scalar_select %p165, %s19, 0
      %s167 = smul.addr %s166, 36
      %s168 = smul.addr %s164, 36
      %s169 = sadd.s32 %s167, %s168
      %s170 = smul.addr %s169, 4
      %s171 = scalar_lea.vmem %s0, %s170
      %p172 = pneg %p49
      %p173 = pneg %p46
      %p174 = pneg %p70
      %p175 = pneg %p67
      %p176 = pneg %p91
      %p177 = pneg %p88
      %p178 = pneg %p119
      %p179 = pneg %p116
      %p180 = scmp.lt.s32.totalorder %s18, 1
      %s181 = scalar_select %p180, %s18, 1
      %p182 = scmp.lt.s32.totalorder %s19, 0
      %s183 = scalar_select %p182, %s19, 0
      %s184 = smul.addr %s183, 32
      %s185 = smul.addr %s181, 32
      %s186 = sadd.s32 %s184, %s185
      %s187 = smul.addr %s186, 8
      %s188 = scalar_lea.vmem %s3, %s187
      %p189 = scmp.lt.s32.totalorder %s18, 1
      %s190 = scalar_select %p189, %s18, 1
      %p191 = scmp.lt.s32.totalorder %s19, 0
      %s192 = scalar_select %p191, %s19, 0
      %s193 = smul.addr %s192, 36
      %s194 = smul.addr %s190, 36
      %s195 = sadd.s32 %s193, %s194
      %s196 = smul.addr %s195, 4
      %s197 = scalar_lea.vmem %s0, %s196
      %p198 = scmp.lt.s32.totalorder %s18, 1
      %s199 = scalar_select %p198, %s18, 1
      %p200 = scmp.lt.s32.totalorder %s19, 0
      %s201 = scalar_select %p200, %s19, 0
      %s202 = smul.addr %s201, 32
      %s203 = smul.addr %s199, 32
      %s204 = sadd.s32 %s202, %s203
      %s205 = smul.addr %s204, 8
      %s206 = scalar_lea.vmem %s3, %s205
      %v208 = vld [vmem:[%s197] sm:$0xf]
      %v209 = vld [vmem:[%s197 + $0x4] sm:$0xf]
      %v210 = vld [vmem:[%s197 + $0x8] sm:$0xf]
      %v211 = vld [vmem:[%s197 + $0xc] sm:$0xf]
      %v212 = vld [vmem:[%s197 + $0x10] sm:$0xf]
      %v213 = vld [vmem:[%s197 + $0x14] sm:$0xf]
      %v214 = vld [vmem:[%s197 + $0x18] sm:$0xf]
      %v215 = vld [vmem:[%s197 + $0x1c] sm:$0xf]
      %v216 = vld [vmem:[%s197 + $0x20] sm:$0xf]
      %v217 = vld [vmem:[%s197 + $0x24] sm:$0xf]
      %v218 = vld [vmem:[%s197 + $0x28] sm:$0xf]
      %v219 = vld [vmem:[%s197 + $0x2c] sm:$0xf]
      %v220 = vld [vmem:[%s197 + $0x30] sm:$0xf]
      %v221 = vld [vmem:[%s197 + $0x34] sm:$0xf]
      %v222 = vld [vmem:[%s197 + $0x38] sm:$0xf]
      %v223 = vld [vmem:[%s197 + $0x3c] sm:$0xf]
      %v224 = vld [vmem:[%s197 + $0x40] sm:$0xf]
      %v225 = vld [vmem:[%s197 + $0x44] sm:$0xf]
      %v226 = vld [vmem:[%s197 + $0x48] sm:$0xf]
      %v227 = vld [vmem:[%s197 + $0x4c] sm:$0xf]
      %v228 = vld [vmem:[%s197 + $0x50] sm:$0xf]
      %v229 = vld [vmem:[%s197 + $0x54] sm:$0xf]
      %v230 = vld [vmem:[%s197 + $0x58] sm:$0xf]
      %v231 = vld [vmem:[%s197 + $0x5c] sm:$0xf]
      %v232 = vld [vmem:[%s197 + $0x60] sm:$0xf]
      %v233 = vld [vmem:[%s197 + $0x64] sm:$0xf]
      %v234 = vld [vmem:[%s197 + $0x68] sm:$0xf]
      %v235 = vld [vmem:[%s197 + $0x6c] sm:$0xf]
      %v236 = vld [vmem:[%s197 + $0x70] sm:$0xf]
      %v237 = vld [vmem:[%s197 + $0x74] sm:$0xf]
      %v238 = vld [vmem:[%s197 + $0x78] sm:$0xf]
      %v239 = vld [vmem:[%s197 + $0x7c] sm:$0xf]
      %v240 = vld [vmem:[%s1] sm:$0xf]
      %v241 = vld [vmem:[%s1 + $0x4] sm:$0x3]
      %v242 = vld [vmem:[%s2] sm:$0x1]
      %v244 = vperm.slane %v242, 0
      %v278 = vunpack.c.l.b16 %v208
      %v279 = vunpack.c.l.b16 %v209
      %v280 = vunpack.c.l.b16 %v210
      %v281 = vunpack.c.l.b16 %v211
      %v282 = vunpack.c.l.b16 %v212
      %v283 = vunpack.c.l.b16 %v213
      %v284 = vunpack.c.l.b16 %v214
      %v285 = vunpack.c.l.b16 %v215
      %v286 = vunpack.c.l.b16 %v216
      %v287 = vunpack.c.l.b16 %v217
      %v288 = vunpack.c.l.b16 %v218
      %v289 = vunpack.c.l.b16 %v219
      %v290 = vunpack.c.l.b16 %v220
      %v291 = vunpack.c.l.b16 %v221
      %v292 = vunpack.c.l.b16 %v222
      %v293 = vunpack.c.l.b16 %v223
      %v294 = vunpack.c.l.b16 %v224
      %v295 = vunpack.c.l.b16 %v225
      %v296 = vunpack.c.l.b16 %v226
      %v297 = vunpack.c.l.b16 %v227
      %v298 = vunpack.c.l.b16 %v228
      %v299 = vunpack.c.l.b16 %v229
      %v300 = vunpack.c.l.b16 %v230
      %v301 = vunpack.c.l.b16 %v231
      %v302 = vunpack.c.l.b16 %v232
      %v303 = vunpack.c.l.b16 %v233
      %v304 = vunpack.c.l.b16 %v234
      %v305 = vunpack.c.l.b16 %v235
      %v306 = vunpack.c.l.b16 %v236
      %v307 = vunpack.c.l.b16 %v237
      %v308 = vunpack.c.l.b16 %v238
      %v309 = vunpack.c.l.b16 %v239
      %v310 = vpack.c.b16 %v279, %v278
      %v311 = vpack.c.b16 %v281, %v280
      %v312 = vpack.c.b16 %v283, %v282
      %v313 = vpack.c.b16 %v285, %v284
      %v314 = vpack.c.b16 %v287, %v286
      %v315 = vpack.c.b16 %v289, %v288
      %v316 = vpack.c.b16 %v291, %v290
      %v317 = vpack.c.b16 %v293, %v292
      %v318 = vpack.c.b16 %v295, %v294
      %v319 = vpack.c.b16 %v297, %v296
      %v320 = vpack.c.b16 %v299, %v298
      %v321 = vpack.c.b16 %v301, %v300
      %v322 = vpack.c.b16 %v303, %v302
      %v323 = vpack.c.b16 %v305, %v304
      %v324 = vpack.c.b16 %v307, %v306
      %v325 = vpack.c.b16 %v309, %v308
      %v328 = vunpack.c.l.b16 %v240
      %v329 = vunpack.c.l.b16 %v241
      %v330 = vpack.c.b16 %v329, %v328
      %vm331 = vcmask 97280
      %v333 = vsel %vm331, %v310, 0
      %v336 = vsel %vm331, %v311, 0
      %v339 = vsel %vm331, %v312, 0
      %v342 = vsel %vm331, %v313, 0
      %v345 = vsel %vm331, %v314, 0
      %v348 = vsel %vm331, %v315, 0
      %v351 = vsel %vm331, %v316, 0
      %v354 = vsel %vm331, %v317, 0
      %v357 = vsel %vm331, %v318, 0
      %v360 = vsel %vm331, %v319, 0
      %v363 = vsel %vm331, %v320, 0
      %v366 = vsel %vm331, %v321, 0
      %v369 = vsel %vm331, %v322, 0
      %v372 = vsel %vm331, %v323, 0
      %v375 = vsel %vm331, %v324, 0
      %v378 = vsel %vm331, %v325, 0
      %vm380 = vcmask 1045504
      %v382 = vsel %vm380, %v330, 0
      %384 = vmatpush.bf16.msra.mxu0 0
      %385 = vmatpush.bf16.msra.mxu0 0
      %386 = vmatpush.bf16.msra.mxu0 0
      %387 = vmatpush.bf16.msra.mxu0 0
      %388 = vmatpush.bf16.msra.mxu0 0
      %389 = vmatpush.bf16.msra.mxu0 0
      %390 = vmatpush.bf16.msra.mxu0 0
      %391 = vmatpush.bf16.msra.mxu0 %v382
      %392 = vmatmul.bf16.gmra.mxu0 %v333
      %v393 = vpop.f32.mrf.mxu0
      %v394 = vadd.f32 %v244, %v393
      %v395 = vpop.f32.mrf.mxu0
      %v396 = vadd.f32 %v244, %v395
      %397 = vmatmul.bf16.gmra.mxu0 %v336
      %v398 = vpop.f32.mrf.mxu0
      %v399 = vadd.f32 %v244, %v398
      %v400 = vpop.f32.mrf.mxu0
      %v401 = vadd.f32 %v244, %v400
      %402 = vmatmul.bf16.gmra.mxu0 %v339
      %v403 = vpop.f32.mrf.mxu0
      %v404 = vadd.f32 %v244, %v403
      %v405 = vpop.f32.mrf.mxu0
      %v406 = vadd.f32 %v244, %v405
      %407 = vmatmul.bf16.gmra.mxu0 %v342
      %v408 = vpop.f32.mrf.mxu0
      %v409 = vadd.f32 %v244, %v408
      %v410 = vpop.f32.mrf.mxu0
      %v411 = vadd.f32 %v244, %v410
      %412 = vmatmul.bf16.gmra.mxu0 %v345
      %v413 = vpop.f32.mrf.mxu0
      %v414 = vadd.f32 %v244, %v413
      %v415 = vpop.f32.mrf.mxu0
      %v416 = vadd.f32 %v244, %v415
      %417 = vmatmul.bf16.gmra.mxu0 %v348
      %v418 = vpop.f32.mrf.mxu0
      %v419 = vadd.f32 %v244, %v418
      %v420 = vpop.f32.mrf.mxu0
      %v421 = vadd.f32 %v244, %v420
      %422 = vmatmul.bf16.gmra.mxu0 %v351
      %v423 = vpop.f32.mrf.mxu0
      %v424 = vadd.f32 %v244, %v423
      %v425 = vpop.f32.mrf.mxu0
      %v426 = vadd.f32 %v244, %v425
      %427 = vmatmul.bf16.gmra.mxu0 %v354
      %v428 = vpop.f32.mrf.mxu0
      %v429 = vadd.f32 %v244, %v428
      %v430 = vpop.f32.mrf.mxu0
      %v431 = vadd.f32 %v244, %v430
      %432 = vmatmul.bf16.gmra.mxu0 %v357
      %v433 = vpop.f32.mrf.mxu0
      %v434 = vadd.f32 %v244, %v433
      %v435 = vpop.f32.mrf.mxu0
      %v436 = vadd.f32 %v244, %v435
      %437 = vmatmul.bf16.gmra.mxu0 %v360
      %v438 = vpop.f32.mrf.mxu0
      %v439 = vadd.f32 %v244, %v438
      %v440 = vpop.f32.mrf.mxu0
      %v441 = vadd.f32 %v244, %v440
      %442 = vmatmul.bf16.gmra.mxu0 %v363
      %v443 = vpop.f32.mrf.mxu0
      %v444 = vadd.f32 %v244, %v443
      %v445 = vpop.f32.mrf.mxu0
      %v446 = vadd.f32 %v244, %v445
      %447 = vmatmul.bf16.gmra.mxu0 %v366
      %v448 = vpop.f32.mrf.mxu0
      %v449 = vadd.f32 %v244, %v448
      %v450 = vpop.f32.mrf.mxu0
      %v451 = vadd.f32 %v244, %v450
      %452 = vmatmul.bf16.gmra.mxu0 %v369
      %v453 = vpop.f32.mrf.mxu0
      %v454 = vadd.f32 %v244, %v453
      %v455 = vpop.f32.mrf.mxu0
      %v456 = vadd.f32 %v244, %v455
      %457 = vmatmul.bf16.gmra.mxu0 %v372
      %v458 = vpop.f32.mrf.mxu0
      %v459 = vadd.f32 %v244, %v458
      %v460 = vpop.f32.mrf.mxu0
      %v461 = vadd.f32 %v244, %v460
      %462 = vmatmul.bf16.gmra.mxu0 %v375
      %v463 = vpop.f32.mrf.mxu0
      %v464 = vadd.f32 %v244, %v463
      %v465 = vpop.f32.mrf.mxu0
      %v466 = vadd.f32 %v244, %v465
      %467 = vmatmul.bf16.gmra.mxu0 %v378
      %v468 = vpop.f32.mrf.mxu0
      %v469 = vadd.f32 %v244, %v468
      %v470 = vpop.f32.mrf.mxu0
      %v471 = vadd.f32 %v244, %v470
      %472 = vdwg.mxu0
      %473 = vst [vmem:[%s206] sm:$0xff] %v394
      %474 = vst [vmem:[%s206 + $0x8] sm:$0xff] %v396
      %475 = vst [vmem:[%s206 + $0x10] sm:$0xff] %v399
      %476 = vst [vmem:[%s206 + $0x18] sm:$0xff] %v401
      %477 = vst [vmem:[%s206 + $0x20] sm:$0xff] %v404
      %478 = vst [vmem:[%s206 + $0x28] sm:$0xff] %v406
      %479 = vst [vmem:[%s206 + $0x30] sm:$0xff] %v409
      %480 = vst [vmem:[%s206 + $0x38] sm:$0xff] %v411
      %481 = vst [vmem:[%s206 + $0x40] sm:$0xff] %v414
      %482 = vst [vmem:[%s206 + $0x48] sm:$0xff] %v416
      %483 = vst [vmem:[%s206 + $0x50] sm:$0xff] %v419
      %484 = vst [vmem:[%s206 + $0x58] sm:$0xff] %v421
      %485 = vst [vmem:[%s206 + $0x60] sm:$0xff] %v424
      %486 = vst [vmem:[%s206 + $0x68] sm:$0xff] %v426
      %487 = vst [vmem:[%s206 + $0x70] sm:$0xff] %v429
      %488 = vst [vmem:[%s206 + $0x78] sm:$0xff] %v431
      %489 = vst [vmem:[%s206 + $0x80] sm:$0xff] %v434
      %490 = vst [vmem:[%s206 + $0x88] sm:$0xff] %v436
      %491 = vst [vmem:[%s206 + $0x90] sm:$0xff] %v439
      %492 = vst [vmem:[%s206 + $0x98] sm:$0xff] %v441
      %493 = vst [vmem:[%s206 + $0xa0] sm:$0xff] %v444
      %494 = vst [vmem:[%s206 + $0xa8] sm:$0xff] %v446
      %495 = vst [vmem:[%s206 + $0xb0] sm:$0xff] %v449
      %496 = vst [vmem:[%s206 + $0xb8] sm:$0xff] %v451
      %497 = vst [vmem:[%s206 + $0xc0] sm:$0xff] %v454
      %498 = vst [vmem:[%s206 + $0xc8] sm:$0xff] %v456
      %499 = vst [vmem:[%s206 + $0xd0] sm:$0xff] %v459
      %500 = vst [vmem:[%s206 + $0xd8] sm:$0xff] %v461
      %501 = vst [vmem:[%s206 + $0xe0] sm:$0xff] %v464
      %502 = vst [vmem:[%s206 + $0xe8] sm:$0xff] %v466
      %503 = vst [vmem:[%s206 + $0xf0] sm:$0xff] %v469
      %504 = vst [vmem:[%s206 + $0xf8] sm:$0xff] %v471
      %v505 = vld [vmem:[%s197 + $0x8] sm:$0xf]
      %v506 = vld [vmem:[%s197 + $0xc] sm:$0xf]
      %v507 = vld [vmem:[%s197 + $0x10] sm:$0xf]
      %v508 = vld [vmem:[%s197 + $0x14] sm:$0xf]
      %v509 = vld [vmem:[%s197 + $0x18] sm:$0xf]
      %v510 = vld [vmem:[%s197 + $0x1c] sm:$0xf]
      %v511 = vld [vmem:[%s197 + $0x20] sm:$0xf]
      %v512 = vld [vmem:[%s197 + $0x24] sm:$0xf]
      %v513 = vld [vmem:[%s197 + $0x28] sm:$0xf]
      %v514 = vld [vmem:[%s197 + $0x2c] sm:$0xf]
      %v515 = vld [vmem:[%s197 + $0x30] sm:$0xf]
      %v516 = vld [vmem:[%s197 + $0x34] sm:$0xf]
      %v517 = vld [vmem:[%s197 + $0x38] sm:$0xf]
      %v518 = vld [vmem:[%s197 + $0x3c] sm:$0xf]
      %v519 = vld [vmem:[%s197 + $0x40] sm:$0xf]
      %v520 = vld [vmem:[%s197 + $0x44] sm:$0xf]
      %v521 = vld [vmem:[%s197 + $0x48] sm:$0xf]
      %v522 = vld [vmem:[%s197 + $0x4c] sm:$0xf]
      %v523 = vld [vmem:[%s197 + $0x50] sm:$0xf]
      %v524 = vld [vmem:[%s197 + $0x54] sm:$0xf]
      %v525 = vld [vmem:[%s197 + $0x58] sm:$0xf]
      %v526 = vld [vmem:[%s197 + $0x5c] sm:$0xf]
      %v527 = vld [vmem:[%s197 + $0x60] sm:$0xf]
      %v528 = vld [vmem:[%s197 + $0x64] sm:$0xf]
      %v529 = vld [vmem:[%s197 + $0x68] sm:$0xf]
      %v530 = vld [vmem:[%s197 + $0x6c] sm:$0xf]
      %v531 = vld [vmem:[%s197 + $0x70] sm:$0xf]
      %v532 = vld [vmem:[%s197 + $0x74] sm:$0xf]
      %v533 = vld [vmem:[%s197 + $0x78] sm:$0xf]
      %v534 = vld [vmem:[%s197 + $0x7c] sm:$0xf]
      %v535 = vld [vmem:[%s197 + $0x80] sm:$0xf]
      %v536 = vld [vmem:[%s197 + $0x84] sm:$0xf]
      %s537 = scalar_lea.vmem %s1, 8
      %v538 = vld [vmem:[%s537] sm:$0xf]
      %v539 = vld [vmem:[%s537 + $0x4] sm:$0x3]
      %v572 = vunpack.c.l.b16 %v505
      %v573 = vunpack.c.l.b16 %v506
      %v574 = vunpack.c.l.b16 %v507
      %v575 = vunpack.c.l.b16 %v508
      %v576 = vunpack.c.l.b16 %v509
      %v577 = vunpack.c.l.b16 %v510
      %v578 = vunpack.c.l.b16 %v511
      %v579 = vunpack.c.l.b16 %v512
      %v580 = vunpack.c.l.b16 %v513
      %v581 = vunpack.c.l.b16 %v514
      %v582 = vunpack.c.l.b16 %v515
      %v583 = vunpack.c.l.b16 %v516
      %v584 = vunpack.c.l.b16 %v517
      %v585 = vunpack.c.l.b16 %v518
      %v586 = vunpack.c.l.b16 %v519
      %v587 = vunpack.c.l.b16 %v520
      %v588 = vunpack.c.l.b16 %v521
      %v589 = vunpack.c.l.b16 %v522
      %v590 = vunpack.c.l.b16 %v523
      %v591 = vunpack.c.l.b16 %v524
      %v592 = vunpack.c.l.b16 %v525
      %v593 = vunpack.c.l.b16 %v526
      %v594 = vunpack.c.l.b16 %v527
      %v595 = vunpack.c.l.b16 %v528
      %v596 = vunpack.c.l.b16 %v529
      %v597 = vunpack.c.l.b16 %v530
      %v598 = vunpack.c.l.b16 %v531
      %v599 = vunpack.c.l.b16 %v532
      %v600 = vunpack.c.l.b16 %v533
      %v601 = vunpack.c.l.b16 %v534
      %v602 = vunpack.c.l.b16 %v535
      %v603 = vunpack.c.l.b16 %v536
      %v604 = vpack.c.b16 %v573, %v572
      %v605 = vpack.c.b16 %v575, %v574
      %v606 = vpack.c.b16 %v577, %v576
      %v607 = vpack.c.b16 %v579, %v578
      %v608 = vpack.c.b16 %v581, %v580
      %v609 = vpack.c.b16 %v583, %v582
      %v610 = vpack.c.b16 %v585, %v584
      %v611 = vpack.c.b16 %v587, %v586
      %v612 = vpack.c.b16 %v589, %v588
      %v613 = vpack.c.b16 %v591, %v590
      %v614 = vpack.c.b16 %v593, %v592
      %v615 = vpack.c.b16 %v595, %v594
      %v616 = vpack.c.b16 %v597, %v596
      %v617 = vpack.c.b16 %v599, %v598
      %v618 = vpack.c.b16 %v601, %v600
      %v619 = vpack.c.b16 %v603, %v602
      %v622 = vunpack.c.l.b16 %v538
      %v623 = vunpack.c.l.b16 %v539
      %v624 = vpack.c.b16 %v623, %v622
      %v626 = vsel %vm331, %v604, 0
      %v629 = vsel %vm331, %v605, 0
      %v632 = vsel %vm331, %v606, 0
      %v635 = vsel %vm331, %v607, 0
      %v638 = vsel %vm331, %v608, 0
      %v641 = vsel %vm331, %v609, 0
      %v644 = vsel %vm331, %v610, 0
      %v647 = vsel %vm331, %v611, 0
      %v650 = vsel %vm331, %v612, 0
      %v653 = vsel %vm331, %v613, 0
      %v656 = vsel %vm331, %v614, 0
      %v659 = vsel %vm331, %v615, 0
      %v662 = vsel %vm331, %v616, 0
      %v665 = vsel %vm331, %v617, 0
      %v668 = vsel %vm331, %v618, 0
      %v671 = vsel %vm331, %v619, 0
      %v674 = vsel %vm380, %v624, 0
      %676 = vmatpush.bf16.msra.mxu0 0
      %677 = vmatpush.bf16.msra.mxu0 0
      %678 = vmatpush.bf16.msra.mxu0 0
      %679 = vmatpush.bf16.msra.mxu0 0
      %680 = vmatpush.bf16.msra.mxu0 0
      %681 = vmatpush.bf16.msra.mxu0 0
      %682 = vmatpush.bf16.msra.mxu0 0
      %683 = vmatpush.bf16.msra.mxu0 %v674
      %684 = vmatmul.bf16.gmra.mxu0 %v626
      %v685 = vpop.f32.mrf.mxu0
      %v686 = vadd.f32 0.0, %v685
      %v687 = vpop.f32.mrf.mxu0
      %v688 = vadd.f32 0.0, %v687
      %689 = vmatmul.bf16.gmra.mxu0 %v629
      %v690 = vpop.f32.mrf.mxu0
      %v691 = vadd.f32 0.0, %v690
      %v692 = vpop.f32.mrf.mxu0
      %v693 = vadd.f32 0.0, %v692
      %694 = vmatmul.bf16.gmra.mxu0 %v632
      %v695 = vpop.f32.mrf.mxu0
      %v696 = vadd.f32 0.0, %v695
      %v697 = vpop.f32.mrf.mxu0
      %v698 = vadd.f32 0.0, %v697
      %699 = vmatmul.bf16.gmra.mxu0 %v635
      %v700 = vpop.f32.mrf.mxu0
      %v701 = vadd.f32 0.0, %v700
      %v702 = vpop.f32.mrf.mxu0
      %v703 = vadd.f32 0.0, %v702
      %704 = vmatmul.bf16.gmra.mxu0 %v638
      %v705 = vpop.f32.mrf.mxu0
      %v706 = vadd.f32 0.0, %v705
      %v707 = vpop.f32.mrf.mxu0
      %v708 = vadd.f32 0.0, %v707
      %709 = vmatmul.bf16.gmra.mxu0 %v641
      %v710 = vpop.f32.mrf.mxu0
      %v711 = vadd.f32 0.0, %v710
      %v712 = vpop.f32.mrf.mxu0
      %v713 = vadd.f32 0.0, %v712
      %714 = vmatmul.bf16.gmra.mxu0 %v644
      %v715 = vpop.f32.mrf.mxu0
      %v716 = vadd.f32 0.0, %v715
      %v717 = vpop.f32.mrf.mxu0
      %v718 = vadd.f32 0.0, %v717
      %719 = vmatmul.bf16.gmra.mxu0 %v647
      %v720 = vpop.f32.mrf.mxu0
      %v721 = vadd.f32 0.0, %v720
      %v722 = vpop.f32.mrf.mxu0
      %v723 = vadd.f32 0.0, %v722
      %724 = vmatmul.bf16.gmra.mxu0 %v650
      %v725 = vpop.f32.mrf.mxu0
      %v726 = vadd.f32 0.0, %v725
      %v727 = vpop.f32.mrf.mxu0
      %v728 = vadd.f32 0.0, %v727
      %729 = vmatmul.bf16.gmra.mxu0 %v653
      %v730 = vpop.f32.mrf.mxu0
      %v731 = vadd.f32 0.0, %v730
      %v732 = vpop.f32.mrf.mxu0
      %v733 = vadd.f32 0.0, %v732
      %734 = vmatmul.bf16.gmra.mxu0 %v656
      %v735 = vpop.f32.mrf.mxu0
      %v736 = vadd.f32 0.0, %v735
      %v737 = vpop.f32.mrf.mxu0
      %v738 = vadd.f32 0.0, %v737
      %739 = vmatmul.bf16.gmra.mxu0 %v659
      %v740 = vpop.f32.mrf.mxu0
      %v741 = vadd.f32 0.0, %v740
      %v742 = vpop.f32.mrf.mxu0
      %v743 = vadd.f32 0.0, %v742
      %744 = vmatmul.bf16.gmra.mxu0 %v662
      %v745 = vpop.f32.mrf.mxu0
      %v746 = vadd.f32 0.0, %v745
      %v747 = vpop.f32.mrf.mxu0
      %v748 = vadd.f32 0.0, %v747
      %749 = vmatmul.bf16.gmra.mxu0 %v665
      %v750 = vpop.f32.mrf.mxu0
      %v751 = vadd.f32 0.0, %v750
      %v752 = vpop.f32.mrf.mxu0
      %v753 = vadd.f32 0.0, %v752
      %754 = vmatmul.bf16.gmra.mxu0 %v668
      %v755 = vpop.f32.mrf.mxu0
      %v756 = vadd.f32 0.0, %v755
      %v757 = vpop.f32.mrf.mxu0
      %v758 = vadd.f32 0.0, %v757
      %759 = vmatmul.bf16.gmra.mxu0 %v671
      %v760 = vpop.f32.mrf.mxu0
      %v761 = vadd.f32 0.0, %v760
      %v762 = vpop.f32.mrf.mxu0
      %v763 = vadd.f32 0.0, %v762
      %764 = vdwg.mxu0
      %v765 = vld [vmem:[%s206] sm:$0xff]
      %v766 = vld [vmem:[%s206 + $0x8] sm:$0xff]
      %v767 = vld [vmem:[%s206 + $0x10] sm:$0xff]
      %v768 = vld [vmem:[%s206 + $0x18] sm:$0xff]
      %v769 = vld [vmem:[%s206 + $0x20] sm:$0xff]
      %v770 = vld [vmem:[%s206 + $0x28] sm:$0xff]
      %v771 = vld [vmem:[%s206 + $0x30] sm:$0xff]
      %v772 = vld [vmem:[%s206 + $0x38] sm:$0xff]
      %v773 = vld [vmem:[%s206 + $0x40] sm:$0xff]
      %v774 = vld [vmem:[%s206 + $0x48] sm:$0xff]
      %v775 = vld [vmem:[%s206 + $0x50] sm:$0xff]
      %v776 = vld [vmem:[%s206 + $0x58] sm:$0xff]
      %v777 = vld [vmem:[%s206 + $0x60] sm:$0xff]
      %v778 = vld [vmem:[%s206 + $0x68] sm:$0xff]
      %v779 = vld [vmem:[%s206 + $0x70] sm:$0xff]
      %v780 = vld [vmem:[%s206 + $0x78] sm:$0xff]
      %v781 = vld [vmem:[%s206 + $0x80] sm:$0xff]
      %v782 = vld [vmem:[%s206 + $0x88] sm:$0xff]
      %v783 = vld [vmem:[%s206 + $0x90] sm:$0xff]
      %v784 = vld [vmem:[%s206 + $0x98] sm:$0xff]
      %v785 = vld [vmem:[%s206 + $0xa0] sm:$0xff]
      %v786 = vld [vmem:[%s206 + $0xa8] sm:$0xff]
      %v787 = vld [vmem:[%s206 + $0xb0] sm:$0xff]
      %v788 = vld [vmem:[%s206 + $0xb8] sm:$0xff]
      %v789 = vld [vmem:[%s206 + $0xc0] sm:$0xff]
      %v790 = vld [vmem:[%s206 + $0xc8] sm:$0xff]
      %v791 = vld [vmem:[%s206 + $0xd0] sm:$0xff]
      %v792 = vld [vmem:[%s206 + $0xd8] sm:$0xff]
      %v793 = vld [vmem:[%s206 + $0xe0] sm:$0xff]
      %v794 = vld [vmem:[%s206 + $0xe8] sm:$0xff]
      %v795 = vld [vmem:[%s206 + $0xf0] sm:$0xff]
      %v796 = vld [vmem:[%s206 + $0xf8] sm:$0xff]
      %v797 = vadd.f32 %v765, %v686
      %v798 = vadd.f32 %v766, %v688
      %v799 = vadd.f32 %v767, %v691
      %v800 = vadd.f32 %v768, %v693
      %v801 = vadd.f32 %v769, %v696
      %v802 = vadd.f32 %v770, %v698
      %v803 = vadd.f32 %v771, %v701
      %v804 = vadd.f32 %v772, %v703
      %v805 = vadd.f32 %v773, %v706
      %v806 = vadd.f32 %v774, %v708
      %v807 = vadd.f32 %v775, %v711
      %v808 = vadd.f32 %v776, %v713
      %v809 = vadd.f32 %v777, %v716
      %v810 = vadd.f32 %v778, %v718
      %v811 = vadd.f32 %v779, %v721
      %v812 = vadd.f32 %v780, %v723
      %v813 = vadd.f32 %v781, %v726
      %v814 = vadd.f32 %v782, %v728
      %v815 = vadd.f32 %v783, %v731
      %v816 = vadd.f32 %v784, %v733
      %v817 = vadd.f32 %v785, %v736
      %v818 = vadd.f32 %v786, %v738
      %v819 = vadd.f32 %v787, %v741
      %v820 = vadd.f32 %v788, %v743
      %v821 = vadd.f32 %v789, %v746
      %v822 = vadd.f32 %v790, %v748
      %v823 = vadd.f32 %v791, %v751
      %v824 = vadd.f32 %v792, %v753
      %v825 = vadd.f32 %v793, %v756
      %v826 = vadd.f32 %v794, %v758
      %v827 = vadd.f32 %v795, %v761
      %v828 = vadd.f32 %v796, %v763
      %829 = vst [vmem:[%s206] sm:$0xff] %v797
      %830 = vst [vmem:[%s206 + $0x8] sm:$0xff] %v798
      %831 = vst [vmem:[%s206 + $0x10] sm:$0xff] %v799
      %832 = vst [vmem:[%s206 + $0x18] sm:$0xff] %v800
      %833 = vst [vmem:[%s206 + $0x20] sm:$0xff] %v801
      %834 = vst [vmem:[%s206 + $0x28] sm:$0xff] %v802
      %835 = vst [vmem:[%s206 + $0x30] sm:$0xff] %v803
      %836 = vst [vmem:[%s206 + $0x38] sm:$0xff] %v804
      %837 = vst [vmem:[%s206 + $0x40] sm:$0xff] %v805
      %838 = vst [vmem:[%s206 + $0x48] sm:$0xff] %v806
      %839 = vst [vmem:[%s206 + $0x50] sm:$0xff] %v807
      %840 = vst [vmem:[%s206 + $0x58] sm:$0xff] %v808
      %841 = vst [vmem:[%s206 + $0x60] sm:$0xff] %v809
      %842 = vst [vmem:[%s206 + $0x68] sm:$0xff] %v810
      %843 = vst [vmem:[%s206 + $0x70] sm:$0xff] %v811
      %844 = vst [vmem:[%s206 + $0x78] sm:$0xff] %v812
      %845 = vst [vmem:[%s206 + $0x80] sm:$0xff] %v813
      %846 = vst [vmem:[%s206 + $0x88] sm:$0xff] %v814
      %847 = vst [vmem:[%s206 + $0x90] sm:$0xff] %v815
      %848 = vst [vmem:[%s206 + $0x98] sm:$0xff] %v816
      %849 = vst [vmem:[%s206 + $0xa0] sm:$0xff] %v817
      %850 = vst [vmem:[%s206 + $0xa8] sm:$0xff] %v818
      %851 = vst [vmem:[%s206 + $0xb0] sm:$0xff] %v819
      %852 = vst [vmem:[%s206 + $0xb8] sm:$0xff] %v820
      %853 = vst [vmem:[%s206 + $0xc0] sm:$0xff] %v821
      %854 = vst [vmem:[%s206 + $0xc8] sm:$0xff] %v822
      %855 = vst [vmem:[%s206 + $0xd0] sm:$0xff] %v823
      %856 = vst [vmem:[%s206 + $0xd8] sm:$0xff] %v824
      %857 = vst [vmem:[%s206 + $0xe0] sm:$0xff] %v825
      %858 = vst [vmem:[%s206 + $0xe8] sm:$0xff] %v826
      %859 = vst [vmem:[%s206 + $0xf0] sm:$0xff] %v827
      %860 = vst [vmem:[%s206 + $0xf8] sm:$0xff] %v828
      %v861 = vld [vmem:[%s197 + $0x10] sm:$0xf]
      %v862 = vld [vmem:[%s197 + $0x14] sm:$0xf]
      %v863 = vld [vmem:[%s197 + $0x18] sm:$0xf]
      %v864 = vld [vmem:[%s197 + $0x1c] sm:$0xf]
      %v865 = vld [vmem:[%s197 + $0x20] sm:$0xf]
      %v866 = vld [vmem:[%s197 + $0x24] sm:$0xf]
      %v867 = vld [vmem:[%s197 + $0x28] sm:$0xf]
      %v868 = vld [vmem:[%s197 + $0x2c] sm:$0xf]
      %v869 = vld [vmem:[%s197 + $0x30] sm:$0xf]
      %v870 = vld [vmem:[%s197 + $0x34] sm:$0xf]
      %v871 = vld [vmem:[%s197 + $0x38] sm:$0xf]
      %v872 = vld [vmem:[%s197 + $0x3c] sm:$0xf]
      %v873 = vld [vmem:[%s197 + $0x40] sm:$0xf]
      %v874 = vld [vmem:[%s197 + $0x44] sm:$0xf]
      %v875 = vld [vmem:[%s197 + $0x48] sm:$0xf]
      %v876 = vld [vmem:[%s197 + $0x4c] sm:$0xf]
      %v877 = vld [vmem:[%s197 + $0x50] sm:$0xf]
      %v878 = vld [vmem:[%s197 + $0x54] sm:$0xf]
      %v879 = vld [vmem:[%s197 + $0x58] sm:$0xf]
      %v880 = vld [vmem:[%s197 + $0x5c] sm:$0xf]
      %v881 = vld [vmem:[%s197 + $0x60] sm:$0xf]
      %v882 = vld [vmem:[%s197 + $0x64] sm:$0xf]
      %v883 = vld [vmem:[%s197 + $0x68] sm:$0xf]
      %v884 = vld [vmem:[%s197 + $0x6c] sm:$0xf]
      %v885 = vld [vmem:[%s197 + $0x70] sm:$0xf]
      %v886 = vld [vmem:[%s197 + $0x74] sm:$0xf]
      %v887 = vld [vmem:[%s197 + $0x78] sm:$0xf]
      %v888 = vld [vmem:[%s197 + $0x7c] sm:$0xf]
      %v889 = vld [vmem:[%s197 + $0x80] sm:$0xf]
      %v890 = vld [vmem:[%s197 + $0x84] sm:$0xf]
      %v891 = vld [vmem:[%s197 + $0x88] sm:$0xf]
      %v892 = vld [vmem:[%s197 + $0x8c] sm:$0xf]
      %s893 = scalar_lea.vmem %s1, 16
      %v894 = vld [vmem:[%s893] sm:$0xf]
      %v895 = vld [vmem:[%s893 + $0x4] sm:$0x3]
      %v928 = vunpack.c.l.b16 %v861
      %v929 = vunpack.c.l.b16 %v862
      %v930 = vunpack.c.l.b16 %v863
      %v931 = vunpack.c.l.b16 %v864
      %v932 = vunpack.c.l.b16 %v865
      %v933 = vunpack.c.l.b16 %v866
      %v934 = vunpack.c.l.b16 %v867
      %v935 = vunpack.c.l.b16 %v868
      %v936 = vunpack.c.l.b16 %v869
      %v937 = vunpack.c.l.b16 %v870
      %v938 = vunpack.c.l.b16 %v871
      %v939 = vunpack.c.l.b16 %v872
      %v940 = vunpack.c.l.b16 %v873
      %v941 = vunpack.c.l.b16 %v874
      %v942 = vunpack.c.l.b16 %v875
      %v943 = vunpack.c.l.b16 %v876
      %v944 = vunpack.c.l.b16 %v877
      %v945 = vunpack.c.l.b16 %v878
      %v946 = vunpack.c.l.b16 %v879
      %v947 = vunpack.c.l.b16 %v880
      %v948 = vunpack.c.l.b16 %v881
      %v949 = vunpack.c.l.b16 %v882
      %v950 = vunpack.c.l.b16 %v883
      %v951 = vunpack.c.l.b16 %v884
      %v952 = vunpack.c.l.b16 %v885
      %v953 = vunpack.c.l.b16 %v886
      %v954 = vunpack.c.l.b16 %v887
      %v955 = vunpack.c.l.b16 %v888
      %v956 = vunpack.c.l.b16 %v889
      %v957 = vunpack.c.l.b16 %v890
      %v958 = vunpack.c.l.b16 %v891
      %v959 = vunpack.c.l.b16 %v892
      %v960 = vpack.c.b16 %v929, %v928
      %v961 = vpack.c.b16 %v931, %v930
      %v962 = vpack.c.b16 %v933, %v932
      %v963 = vpack.c.b16 %v935, %v934
      %v964 = vpack.c.b16 %v937, %v936
      %v965 = vpack.c.b16 %v939, %v938
      %v966 = vpack.c.b16 %v941, %v940
      %v967 = vpack.c.b16 %v943, %v942
      %v968 = vpack.c.b16 %v945, %v944
      %v969 = vpack.c.b16 %v947, %v946
      %v970 = vpack.c.b16 %v949, %v948
      %v971 = vpack.c.b16 %v951, %v950
      %v972 = vpack.c.b16 %v953, %v952
      %v973 = vpack.c.b16 %v955, %v954
      %v974 = vpack.c.b16 %v957, %v956
      %v975 = vpack.c.b16 %v959, %v958
      %v978 = vunpack.c.l.b16 %v894
      %v979 = vunpack.c.l.b16 %v895
      %v980 = vpack.c.b16 %v979, %v978
      %v982 = vsel %vm331, %v960, 0
      %v985 = vsel %vm331, %v961, 0
      %v988 = vsel %vm331, %v962, 0
      %v991 = vsel %vm331, %v963, 0
      %v994 = vsel %vm331, %v964, 0
      %v997 = vsel %vm331, %v965, 0
      %v1000 = vsel %vm331, %v966, 0
      %v1003 = vsel %vm331, %v967, 0
      %v1006 = vsel %vm331, %v968, 0
      %v1009 = vsel %vm331, %v969, 0
      %v1012 = vsel %vm331, %v970, 0
      %v1015 = vsel %vm331, %v971, 0
      %v1018 = vsel %vm331, %v972, 0
      %v1021 = vsel %vm331, %v973, 0
      %v1024 = vsel %vm331, %v974, 0
      %v1027 = vsel %vm331, %v975, 0
      %v1030 = vsel %vm380, %v980, 0
      %1032 = vmatpush.bf16.msra.mxu0 0
      %1033 = vmatpush.bf16.msra.mxu0 0
      %1034 = vmatpush.bf16.msra.mxu0 0
      %1035 = vmatpush.bf16.msra.mxu0 0
      %1036 = vmatpush.bf16.msra.mxu0 0
      %1037 = vmatpush.bf16.msra.mxu0 0
      %1038 = vmatpush.bf16.msra.mxu0 0
      %1039 = vmatpush.bf16.msra.mxu0 %v1030
      %1040 = vmatmul.bf16.gmra.mxu0 %v982
      %v1041 = vpop.f32.mrf.mxu0
      %v1042 = vadd.f32 0.0, %v1041
      %v1043 = vpop.f32.mrf.mxu0
      %v1044 = vadd.f32 0.0, %v1043
      %1045 = vmatmul.bf16.gmra.mxu0 %v985
      %v1046 = vpop.f32.mrf.mxu0
      %v1047 = vadd.f32 0.0, %v1046
      %v1048 = vpop.f32.mrf.mxu0
      %v1049 = vadd.f32 0.0, %v1048
      %1050 = vmatmul.bf16.gmra.mxu0 %v988
      %v1051 = vpop.f32.mrf.mxu0
      %v1052 = vadd.f32 0.0, %v1051
      %v1053 = vpop.f32.mrf.mxu0
      %v1054 = vadd.f32 0.0, %v1053
      %1055 = vmatmul.bf16.gmra.mxu0 %v991
      %v1056 = vpop.f32.mrf.mxu0
      %v1057 = vadd.f32 0.0, %v1056
      %v1058 = vpop.f32.mrf.mxu0
      %v1059 = vadd.f32 0.0, %v1058
      %1060 = vmatmul.bf16.gmra.mxu0 %v994
      %v1061 = vpop.f32.mrf.mxu0
      %v1062 = vadd.f32 0.0, %v1061
      %v1063 = vpop.f32.mrf.mxu0
      %v1064 = vadd.f32 0.0, %v1063
      %1065 = vmatmul.bf16.gmra.mxu0 %v997
      %v1066 = vpop.f32.mrf.mxu0
      %v1067 = vadd.f32 0.0, %v1066
      %v1068 = vpop.f32.mrf.mxu0
      %v1069 = vadd.f32 0.0, %v1068
      %1070 = vmatmul.bf16.gmra.mxu0 %v1000
      %v1071 = vpop.f32.mrf.mxu0
      %v1072 = vadd.f32 0.0, %v1071
      %v1073 = vpop.f32.mrf.mxu0
      %v1074 = vadd.f32 0.0, %v1073
      %1075 = vmatmul.bf16.gmra.mxu0 %v1003
      %v1076 = vpop.f32.mrf.mxu0
      %v1077 = vadd.f32 0.0, %v1076
      %v1078 = vpop.f32.mrf.mxu0
      %v1079 = vadd.f32 0.0, %v1078
      %1080 = vmatmul.bf16.gmra.mxu0 %v1006
      %v1081 = vpop.f32.mrf.mxu0
      %v1082 = vadd.f32 0.0, %v1081
      %v1083 = vpop.f32.mrf.mxu0
      %v1084 = vadd.f32 0.0, %v1083
      %1085 = vmatmul.bf16.gmra.mxu0 %v1009
      %v1086 = vpop.f32.mrf.mxu0
      %v1087 = vadd.f32 0.0, %v1086
      %v1088 = vpop.f32.mrf.mxu0
      %v1089 = vadd.f32 0.0, %v1088
      %1090 = vmatmul.bf16.gmra.mxu0 %v1012
      %v1091 = vpop.f32.mrf.mxu0
      %v1092 = vadd.f32 0.0, %v1091
      %v1093 = vpop.f32.mrf.mxu0
      %v1094 = vadd.f32 0.0, %v1093
      %1095 = vmatmul.bf16.gmra.mxu0 %v1015
      %v1096 = vpop.f32.mrf.mxu0
      %v1097 = vadd.f32 0.0, %v1096
      %v1098 = vpop.f32.mrf.mxu0
      %v1099 = vadd.f32 0.0, %v1098
      %1100 = vmatmul.bf16.gmra.mxu0 %v1018
      %v1101 = vpop.f32.mrf.mxu0
      %v1102 = vadd.f32 0.0, %v1101
      %v1103 = vpop.f32.mrf.mxu0
      %v1104 = vadd.f32 0.0, %v1103
      %1105 = vmatmul.bf16.gmra.mxu0 %v1021
      %v1106 = vpop.f32.mrf.mxu0
      %v1107 = vadd.f32 0.0, %v1106
      %v1108 = vpop.f32.mrf.mxu0
      %v1109 = vadd.f32 0.0, %v1108
      %1110 = vmatmul.bf16.gmra.mxu0 %v1024
      %v1111 = vpop.f32.mrf.mxu0
      %v1112 = vadd.f32 0.0, %v1111
      %v1113 = vpop.f32.mrf.mxu0
      %v1114 = vadd.f32 0.0, %v1113
      %1115 = vmatmul.bf16.gmra.mxu0 %v1027
      %v1116 = vpop.f32.mrf.mxu0
      %v1117 = vadd.f32 0.0, %v1116
      %v1118 = vpop.f32.mrf.mxu0
      %v1119 = vadd.f32 0.0, %v1118
      %1120 = vdwg.mxu0
      %v1121 = vld [vmem:[%s206] sm:$0xff]
      %v1122 = vld [vmem:[%s206 + $0x8] sm:$0xff]
      %v1123 = vld [vmem:[%s206 + $0x10] sm:$0xff]
      %v1124 = vld [vmem:[%s206 + $0x18] sm:$0xff]
      %v1125 = vld [vmem:[%s206 + $0x20] sm:$0xff]
      %v1126 = vld [vmem:[%s206 + $0x28] sm:$0xff]
      %v1127 = vld [vmem:[%s206 + $0x30] sm:$0xff]
      %v1128 = vld [vmem:[%s206 + $0x38] sm:$0xff]
      %v1129 = vld [vmem:[%s206 + $0x40] sm:$0xff]
      %v1130 = vld [vmem:[%s206 + $0x48] sm:$0xff]
      %v1131 = vld [vmem:[%s206 + $0x50] sm:$0xff]
      %v1132 = vld [vmem:[%s206 + $0x58] sm:$0xff]
      %v1133 = vld [vmem:[%s206 + $0x60] sm:$0xff]
      %v1134 = vld [vmem:[%s206 + $0x68] sm:$0xff]
      %v1135 = vld [vmem:[%s206 + $0x70] sm:$0xff]
      %v1136 = vld [vmem:[%s206 + $0x78] sm:$0xff]
      %v1137 = vld [vmem:[%s206 + $0x80] sm:$0xff]
      %v1138 = vld [vmem:[%s206 + $0x88] sm:$0xff]
      %v1139 = vld [vmem:[%s206 + $0x90] sm:$0xff]
      %v1140 = vld [vmem:[%s206 + $0x98] sm:$0xff]
      %v1141 = vld [vmem:[%s206 + $0xa0] sm:$0xff]
      %v1142 = vld [vmem:[%s206 + $0xa8] sm:$0xff]
      %v1143 = vld [vmem:[%s206 + $0xb0] sm:$0xff]
      %v1144 = vld [vmem:[%s206 + $0xb8] sm:$0xff]
      %v1145 = vld [vmem:[%s206 + $0xc0] sm:$0xff]
      %v1146 = vld [vmem:[%s206 + $0xc8] sm:$0xff]
      %v1147 = vld [vmem:[%s206 + $0xd0] sm:$0xff]
      %v1148 = vld [vmem:[%s206 + $0xd8] sm:$0xff]
      %v1149 = vld [vmem:[%s206 + $0xe0] sm:$0xff]
      %v1150 = vld [vmem:[%s206 + $0xe8] sm:$0xff]
      %v1151 = vld [vmem:[%s206 + $0xf0] sm:$0xff]
      %v1152 = vld [vmem:[%s206 + $0xf8] sm:$0xff]
      %v1153 = vadd.f32 %v1121, %v1042
      %v1154 = vadd.f32 %v1122, %v1044
      %v1155 = vadd.f32 %v1123, %v1047
      %v1156 = vadd.f32 %v1124, %v1049
      %v1157 = vadd.f32 %v1125, %v1052
      %v1158 = vadd.f32 %v1126, %v1054
      %v1159 = vadd.f32 %v1127, %v1057
      %v1160 = vadd.f32 %v1128, %v1059
      %v1161 = vadd.f32 %v1129, %v1062
      %v1162 = vadd.f32 %v1130, %v1064
      %v1163 = vadd.f32 %v1131, %v1067
      %v1164 = vadd.f32 %v1132, %v1069
      %v1165 = vadd.f32 %v1133, %v1072
      %v1166 = vadd.f32 %v1134, %v1074
      %v1167 = vadd.f32 %v1135, %v1077
      %v1168 = vadd.f32 %v1136, %v1079
      %v1169 = vadd.f32 %v1137, %v1082
      %v1170 = vadd.f32 %v1138, %v1084
      %v1171 = vadd.f32 %v1139, %v1087
      %v1172 = vadd.f32 %v1140, %v1089
      %v1173 = vadd.f32 %v1141, %v1092
      %v1174 = vadd.f32 %v1142, %v1094
      %v1175 = vadd.f32 %v1143, %v1097
      %v1176 = vadd.f32 %v1144, %v1099
      %v1177 = vadd.f32 %v1145, %v1102
      %v1178 = vadd.f32 %v1146, %v1104
      %v1179 = vadd.f32 %v1147, %v1107
      %v1180 = vadd.f32 %v1148, %v1109
      %v1181 = vadd.f32 %v1149, %v1112
      %v1182 = vadd.f32 %v1150, %v1114
      %v1183 = vadd.f32 %v1151, %v1117
      %v1184 = vadd.f32 %v1152, %v1119
      %1185 = vst [vmem:[%s206] sm:$0xff] %v1153
      %1186 = vst [vmem:[%s206 + $0x8] sm:$0xff] %v1154
      %1187 = vst [vmem:[%s206 + $0x10] sm:$0xff] %v1155
      %1188 = vst [vmem:[%s206 + $0x18] sm:$0xff] %v1156
      %1189 = vst [vmem:[%s206 + $0x20] sm:$0xff] %v1157
      %1190 = vst [vmem:[%s206 + $0x28] sm:$0xff] %v1158
      %1191 = vst [vmem:[%s206 + $0x30] sm:$0xff] %v1159
      %1192 = vst [vmem:[%s206 + $0x38] sm:$0xff] %v1160
      %1193 = vst [vmem:[%s206 + $0x40] sm:$0xff] %v1161
      %1194 = vst [vmem:[%s206 + $0x48] sm:$0xff] %v1162
      %1195 = vst [vmem:[%s206 + $0x50] sm:$0xff] %v1163
      %1196 = vst [vmem:[%s206 + $0x58] sm:$0xff] %v1164
      %1197 = vst [vmem:[%s206 + $0x60] sm:$0xff] %v1165
      %1198 = vst [vmem:[%s206 + $0x68] sm:$0xff] %v1166
      %1199 = vst [vmem:[%s206 + $0x70] sm:$0xff] %v1167
      %1200 = vst [vmem:[%s206 + $0x78] sm:$0xff] %v1168
      %1201 = vst [vmem:[%s206 + $0x80] sm:$0xff] %v1169
      %1202 = vst [vmem:[%s206 + $0x88] sm:$0xff] %v1170
      %1203 = vst [vmem:[%s206 + $0x90] sm:$0xff] %v1171
      %1204 = vst [vmem:[%s206 + $0x98] sm:$0xff] %v1172
      %1205 = vst [vmem:[%s206 + $0xa0] sm:$0xff] %v1173
      %1206 = vst [vmem:[%s206 + $0xa8] sm:$0xff] %v1174
      %1207 = vst [vmem:[%s206 + $0xb0] sm:$0xff] %v1175
      %1208 = vst [vmem:[%s206 + $0xb8] sm:$0xff] %v1176
      %1209 = vst [vmem:[%s206 + $0xc0] sm:$0xff] %v1177
      %1210 = vst [vmem:[%s206 + $0xc8] sm:$0xff] %v1178
      %1211 = vst [vmem:[%s206 + $0xd0] sm:$0xff] %v1179
      %1212 = vst [vmem:[%s206 + $0xd8] sm:$0xff] %v1180
      %1213 = vst [vmem:[%s206 + $0xe0] sm:$0xff] %v1181
      %1214 = vst [vmem:[%s206 + $0xe8] sm:$0xff] %v1182
      %1215 = vst [vmem:[%s206 + $0xf0] sm:$0xff] %v1183
      %1216 = vst [vmem:[%s206 + $0xf8] sm:$0xff] %v1184
      %p1217 = scmp.lt.s32.totalorder %s18, 1
      %s1218 = scalar_select %p1217, %s18, 1
      %p1219 = scmp.lt.s32.totalorder %s19, 0
      %s1220 = scalar_select %p1219, %s19, 0
      %s1221 = smul.addr %s1220, 32
      %s1222 = smul.addr %s1218, 32
      %s1223 = sadd.s32 %s1221, %s1222
      %s1224 = smul.addr %s1223, 8
      %s1225 = scalar_lea.vmem %s3, %s1224
      // Predicated region
      $region33: #{conv_bn_relu_forward.1} parent=31 // pred_check
        %p1226 = pneg %p116
      $region34: #{conv_bn_relu_forward.1} parent=31 // pred_check_branch
        %1228 = sbr.rel (%p1226) target = $region36
      $region35: #{conv_bn_relu_forward.1} parent=31 // pred_region
        _
      $region36: #{conv_bn_relu_forward.1} parent=31 // pred_fallthru
        _
    $region32: #{conv_bn_relu_forward.1} parent=5 // pred_fallthru
      _
    %p1229 = scmp.le.s32.totalorder 2, %s9
    // Predicated region
    $region37: #{conv_bn_relu_forward.1} parent=5 // pred_check
      %p1230 = pneg %p1229
    $region38: #{conv_bn_relu_forward.1} parent=5 // pred_check_branch
      %1232 = sbr.rel (%p1230) target = $region40
    $region39: #{conv_bn_relu_forward.1} parent=5 // pred_region
      %s1233 = ssub.s32 %s9, 2
      // Predicated region
      $region41: #{conv_bn_relu_forward.1} parent=39 // pred_check
        %p1234 = pneg %p122
      $region42: #{conv_bn_relu_forward.1} parent=39 // pred_check_branch
        %1236 = sbr.rel (%p1234) target = $region44
      $region43: #{conv_bn_relu_forward.1} parent=39 // pred_region
        %p1237 = scmp.lt.s32.totalorder %s20, 1
        %s1238 = scalar_select %p1237, %s20, 1
        %p1239 = scmp.lt.s32.totalorder %s21, 0
        %s1240 = scalar_select %p1239, %s21, 0
        %s1241 = smul.addr %s1240, 32
        %s1242 = smul.addr %s1238, 32
        %s1243 = sadd.s32 %s1241, %s1242
        %s1244 = smul.addr %s1243, 8
        %s1245 = scalar_lea.vmem %s3, %s1244
      $region44: #{conv_bn_relu_forward.1} parent=39 // pred_fallthru
        _
    $region40: #{conv_bn_relu_forward.1} parent=5 // pred_fallthru
      _
  $region6: #{conv_bn_relu_forward.1} parent=0 // loop_footer
    %s13 = sadd.s32 1, %s9
  $region7: #{conv_bn_relu_forward.1} parent=0 // loop_footer_branch
    %8 = sbr.rel target = $region3
  $region8: #{conv_bn_relu_forward.1} parent=0 // loop_exit
    _

</llo_original>
